<compile_context>
chip_gen: v7x
topology: tpu7x:2x2x1
jax: 0.10.0
libtpu: 0.0.40
codegen_flags: <defaults>
</compile_context>

<pallas_src>
import functools

import jax
import jax.numpy as jnp
from jax.experimental import pallas as pl
from jax.experimental.pallas import tpu as pltpu


def _cdiv(a, b):
    return -(-a // b)


def _round_up(a, b):
    return _cdiv(a, b) * b


def _num_tensorcores():
    # 2 TensorCores per chip on v7x; 1 on v5e/v6e.
    # TODO(synk): verify with a trace that the leading "parallel" shard axis
    # actually core-splits on a 2-TC part; if not, switch it to
    # pltpu.CORE_PARALLEL (or pl.core_map over create_tensorcore_mesh).
    try:
        kind = jax.devices()[0].device_kind.lower()
        if "v7" in kind:
            return 2
    except Exception:
        pass
    return 1


def _soft_micro_f1_kernel(logits_ref, targets_ref, num_out_ref, den_out_ref, *,
                          activation, has_shard_axis, tiles_per_shard,
                          block_rows, block_cols, m_rows, n_cols,
                          mask_rows, mask_cols):
    if has_shard_axis:
        s, r, c = pl.program_id(0), pl.program_id(1), pl.program_id(2)
    else:
        s, r, c = 0, pl.program_id(0), pl.program_id(1)

    # Output blocks are resident across (r, c): zero them once per shard and
    # accumulate directly into them (no scratch, no final copy).
    @pl.when(jnp.logical_and(r == 0, c == 0))
    def _():
        num_out_ref[...] = jnp.zeros_like(num_out_ref)
        den_out_ref[...] = jnp.zeros_like(den_out_ref)

    x = logits_ref[...].astype(jnp.float32)
    t = targets_ref[...].astype(jnp.float32)
    br, bc = block_rows, block_cols

    if activation == "softmax":
        # Row-wise softmax; the full class axis is always in one block here.
        x_max = jnp.max(x, axis=-1, keepdims=True)
        e = jnp.exp(x - x_max)
        preds = e / jnp.sum(e, axis=-1, keepdims=True)
    else:  # 'sigmoid' (PyTorch default): exact, one transcendental per element
        preds = 0.5 * (jnp.tanh(0.5 * x) + 1.0)

    m_val = jnp.minimum(preds, t)
    d_val = preds + t

    def accumulate(mv, dv):
        # Fold row groups of 8 into the lane-dense resident output blocks with
        # pure VPU adds; no cross-lane/XLU reduction in the hot loop.
        num_out_ref[...] += jnp.sum(mv.reshape(br // 8, 8, bc), axis=0)[None]
        den_out_ref[...] += jnp.sum(dv.reshape(br // 8, 8, bc), axis=0)[None]

    if mask_rows or mask_cols:
        row_tile = (s * tiles_per_shard + r) if has_shard_axis else r
        row_start = row_tile * br
        col_start = c * bc
        conds = []
        if mask_rows:
            conds.append(row_start + br > m_rows)
        if mask_cols:
            conds.append(col_start + bc > n_cols)
        is_tail = conds[0] if len(conds) == 1 else jnp.logical_or(*conds)

        @pl.when(jnp.logical_not(is_tail))
        def _():  # interior tile: unmasked fast path
            accumulate(m_val, d_val)

        @pl.when(is_tail)
        def _():  # tail (or duplicated clamped) tile: cheap broadcast masks
            mv, dv = m_val, d_val
            if mask_rows:
                rmask = (row_start
                         + jax.lax.broadcasted_iota(jnp.int32, (br, 1), 0)
                         ) < m_rows
                mv = jnp.where(rmask, mv, 0.0)
                dv = jnp.where(rmask, dv, 0.0)
            if mask_cols:
                cmask = (col_start
                         + jax.lax.broadcasted_iota(jnp.int32, (1, bc), 1)
                         ) < n_cols
                mv = jnp.where(cmask, mv, 0.0)
                dv = jnp.where(cmask, dv, 0.0)
            accumulate(mv, dv)
    else:
        accumulate(m_val, d_val)


def soft_micro_f1_loss(logits, targets, *, activation: str = "sigmoid",
                       num_shards: int | None = None,
                       target_tile_bytes: int = 4 * 1024 * 1024,
                       max_block_rows: int = 4096,
                       tiled_block_cols: int = 512,
                       full_col_block_max_n: int = 4096):
    """Pallas implementation of SoftMicroF1Loss.forward (returns a scalar)."""
    assert logits.shape == targets.shape
    assert activation in ("sigmoid", "softmax")
    # TODO(synk): the torch module's runtime warnings (targets outside [0,1],
    # loss outside [0,1]) are host-side value checks with no effect on the
    # returned loss; they are intentionally not reproduced in the kernel.

    if logits.ndim == 1:
        logits = logits[None, :]
        targets = targets[None, :]
    elif logits.ndim > 2:
        n_last = logits.shape[-1]
        logits = logits.reshape(-1, n_last)
        targets = targets.reshape(-1, n_last)
    M, N = logits.shape

    if num_shards is None:
        num_shards = _num_tensorcores()
    num_shards = max(1, min(num_shards, _cdiv(M, 8)))

    # ---- column tiling ------------------------------------------------------
    # softmax needs the full class axis per block; sigmoid uses full-N blocks
    # (fully contiguous DMA, no column mask) unless N is large and 128-aligned.
    if activation == "softmax" or N % 128 != 0 or N <= full_col_block_max_n:
        block_cols = N
    else:
        block_cols = tiled_block_cols

    # ---- row tiling ---------------------------------------------------------
    # Budget against 4-byte elements: the f32 upcast / preds / min / sum
    # temporaries are what bound VMEM (v7x: 64 MiB physical), not input bytes.
    block_rows = max(8, (target_tile_bytes // (block_cols * 4)) // 8 * 8)
    block_rows = min(block_rows, max_block_rows,
                     _round_up(_cdiv(M, num_shards), 8))

    num_row_tiles = _cdiv(M, block_rows)
    col_tiles = _cdiv(N, block_cols)
    mask_cols = col_tiles * block_cols > N

    has_shard_axis = num_shards > 1
    if has_shard_axis:
        tiles_per_shard = _cdiv(num_row_tiles, num_shards)
        total_row_tiles = num_shards * tiles_per_shard
    else:
        tiles_per_shard = num_row_tiles
        total_row_tiles = num_row_tiles
    mask_rows = total_row_tiles * block_rows > M
    last_row_tile = num_row_tiles - 1

    kernel = functools.partial(
        _soft_micro_f1_kernel, activation=activation,
        has_shard_axis=has_shard_axis, tiles_per_shard=tiles_per_shard,
        block_rows=block_rows, block_cols=block_cols, m_rows=M, n_cols=N,
        mask_rows=mask_rows, mask_cols=mask_cols)

    out_shape = (
        jax.ShapeDtypeStruct((num_shards, 8, block_cols), jnp.float32),
        jax.ShapeDtypeStruct((num_shards, 8, block_cols), jnp.float32),
    )

    if has_shard_axis:
        grid = (num_shards, tiles_per_shard, col_tiles)

        def in_map(s, r, c):
            # Clamp duplicated tail tiles; the in-kernel row mask zeroes them.
            rb = jnp.minimum(s * tiles_per_shard + r, last_row_tile)
            return (rb, c)

        out_map = lambda s, r, c: (s, 0, 0)
        dim_sem = ("parallel", "arbitrary", "arbitrary")
    else:
        grid = (num_row_tiles, col_tiles)
        in_map = lambda r, c: (r, c)
        out_map = lambda r, c: (0, 0, 0)
        dim_sem = ("arbitrary", "arbitrary")

    num_parts, den_parts = pl.pallas_call(
        kernel,
        out_shape=out_shape,
        grid_spec=pltpu.PrefetchScalarGridSpec(
            num_scalar_prefetch=0,
            grid=grid,
            in_specs=[
                pl.BlockSpec((block_rows, block_cols), in_map),
                pl.BlockSpec((block_rows, block_cols), in_map),
            ],
            out_specs=[
                pl.BlockSpec((1, 8, block_cols), out_map),
                pl.BlockSpec((1, 8, block_cols), out_map),
            ],
        ),
        compiler_params=pltpu.CompilerParams(
            dimension_semantics=dim_sem,
            vmem_limit_bytes=48 * 1024 * 1024,
        ),
    )(logits, targets)

    # Final cross-lane reduction + 1 - 2*a/b over tiny per-core partial slabs.
    return 1.0 - 2.0 * jnp.sum(num_parts) / jnp.sum(den_parts)


def _reference_loss(logits, targets, activation="sigmoid"):
    x = logits.astype(jnp.float32)
    t = targets.astype(jnp.float32)
    preds = jax.nn.softmax(x, axis=-1) if activation == "softmax" else jax.nn.sigmoid(x)
    return 1.0 - 2.0 * jnp.sum(jnp.minimum(preds, t)) / jnp.sum(preds + t)


if __name__ == "__main__":
    key = jax.random.PRNGKey(0)
    k1, k2, k3, k4, k5, k6, k7, k8, k9, k10 = jax.random.split(key, 10)

    # 1) Default sigmoid activation, small multi-label shape (batch=16, C=128).
    logits = jax.random.normal(k1, (16, 128), dtype=jnp.float32)
    targets = (jax.random.uniform(k2, (16, 128)) < 0.25).astype(jnp.float32)
    out = jax.block_until_ready(soft_micro_f1_loss(logits, targets))
    ref = _reference_loss(logits, targets, "sigmoid")
    assert jnp.allclose(out, ref, atol=1e-5, rtol=1e-5), (out, ref)

    # 2) Softmax activation with ragged shapes (exercises the row-tail mask).
    logits2 = jax.random.normal(k3, (13, 96), dtype=jnp.float32)
    targets2 = (jax.random.uniform(k4, (13, 96)) < 0.2).astype(jnp.float32)
    out2 = jax.block_until_ready(
        soft_micro_f1_loss(logits2, targets2, activation="softmax"))
    ref2 = _reference_loss(logits2, targets2, "softmax")
    assert jnp.allclose(out2, ref2, atol=1e-4, rtol=1e-4), (out2, ref2)

    # 3) Sigmoid, full-N column block (N=768 <= 4096 -> single contiguous tile).
    logits3 = jax.random.normal(k5, (32, 768), dtype=jnp.float32)
    targets3 = (jax.random.uniform(k6, (32, 768)) < 0.1).astype(jnp.float32)
    out3 = jax.block_until_ready(soft_micro_f1_loss(logits3, targets3))
    ref3 = _reference_loss(logits3, targets3, "sigmoid")
    assert jnp.allclose(out3, ref3, atol=1e-5, rtol=1e-5), (out3, ref3)

    # 4) Force column tiling + column tail mask (N=640, 128-aligned, 2 tiles).
    logits4 = jax.random.normal(k7, (24, 640), dtype=jnp.float32)
    targets4 = (jax.random.uniform(k8, (24, 640)) < 0.3).astype(jnp.float32)
    out4 = jax.block_until_ready(
        soft_micro_f1_loss(logits4, targets4, full_col_block_max_n=256))
    ref4 = _reference_loss(logits4, targets4, "sigmoid")
    assert jnp.allclose(out4, ref4, atol=1e-5, rtol=1e-5), (out4, ref4)

    # 5) Multiple row tiles with a row tail (interior fast path + masked tail).
    logits5 = jax.random.normal(k9, (20, 128), dtype=jnp.float32)
    targets5 = (jax.random.uniform(k10, (20, 128)) < 0.25).astype(jnp.float32)
    out5 = jax.block_until_ready(
        soft_micro_f1_loss(logits5, targets5, max_block_rows=8))
    ref5 = _reference_loss(logits5, targets5, "sigmoid")
    assert jnp.allclose(out5, ref5, atol=1e-5, rtol=1e-5), (out5, ref5)

    print("KERNEL_OK")
</pallas_src>

<mosaic_0001>
module attributes {stable_mosaic.version = 11 : i64} {
  func.func @_soft_micro_f1_kernel(%arg0: i32, %arg1: i32, %arg2: memref<16x128xf32, #tpu.memory_space<vmem>>, %arg3: memref<16x128xf32, #tpu.memory_space<vmem>>, %arg4: memref<1x8x128xf32, #tpu.memory_space<vmem>>, %arg5: memref<1x8x128xf32, #tpu.memory_space<vmem>>) attributes {dimension_semantics = [#tpu.dimension_semantics<arbitrary>, #tpu.dimension_semantics<arbitrary>], iteration_bounds = array<i64: 1, 1>, scalar_prefetch = 0 : i64, scratch_operands = 0 : i64, tpu.core_type = #tpu.core_type<tc>, window_params = [{transform_indices = @transform_0, window_bounds = array<i64: 16, 128>}, {transform_indices = @transform_1, window_bounds = array<i64: 16, 128>}, {pipeline_mode = #tpu.pipeline_mode<synchronous>, transform_indices = @transform_2, window_bounds = array<i64: 1, 8, 128>}, {pipeline_mode = #tpu.pipeline_mode<synchronous>, transform_indices = @transform_3, window_bounds = array<i64: 1, 8, 128>}]} {
    %c0_i32 = arith.constant 0 : i32
    %0 = arith.cmpi eq, %arg0, %c0_i32 : i32
    %c0_i32_0 = arith.constant 0 : i32
    %1 = arith.cmpi eq, %arg1, %c0_i32_0 : i32
    %2 = arith.andi %0, %1 : i1
    %3 = arith.extui %2 : i1 to i32
    %c0_i32_1 = arith.constant 0 : i32
    %4 = arith.cmpi ne, %3, %c0_i32_1 : i32
    scf.if %4 {
      %cst_21 = arith.constant 0.000000e+00 : f32
      %28 = vector.broadcast %cst_21 : f32 to vector<1x8x128xf32>
      %c0_22 = arith.constant 0 : index
      %c0_23 = arith.constant 0 : index
      %c0_24 = arith.constant 0 : index
      %29 = vector.load %arg4[%c0_22, %c0_23, %c0_24] : memref<1x8x128xf32, #tpu.memory_space<vmem>>, vector<1x8x128xf32>
      tpu.vector_store %arg4[%c0_22, %c0_23, %c0_24], %28 {strides = array<i32>} : memref<1x8x128xf32, #tpu.memory_space<vmem>>, vector<1x8x128xf32>,
      %cst_25 = arith.constant 0.000000e+00 : f32
      %30 = vector.broadcast %cst_25 : f32 to vector<1x8x128xf32>
      %c0_26 = arith.constant 0 : index
      %c0_27 = arith.constant 0 : index
      %c0_28 = arith.constant 0 : index
      %31 = vector.load %arg5[%c0_26, %c0_27, %c0_28] : memref<1x8x128xf32, #tpu.memory_space<vmem>>, vector<1x8x128xf32>
      tpu.vector_store %arg5[%c0_26, %c0_27, %c0_28], %30 {strides = array<i32>} : memref<1x8x128xf32, #tpu.memory_space<vmem>>, vector<1x8x128xf32>,
    } else {
    }
    %c0 = arith.constant 0 : index
    %c0_2 = arith.constant 0 : index
    %5 = vector.load %arg2[%c0, %c0_2] : memref<16x128xf32, #tpu.memory_space<vmem>>, vector<16x128xf32>
    %c0_3 = arith.constant 0 : index
    %c0_4 = arith.constant 0 : index
    %6 = vector.load %arg3[%c0_3, %c0_4] : memref<16x128xf32, #tpu.memory_space<vmem>>, vector<16x128xf32>
    %cst = arith.constant 5.000000e-01 : f32
    %7 = vector.broadcast %cst : f32 to vector<16x128xf32>
    %8 = arith.mulf %7, %5 : vector<16x128xf32>
    %9 = math.tanh %8 : vector<16x128xf32>
    %cst_5 = arith.constant 1.000000e+00 : f32
    %10 = vector.broadcast %cst_5 : f32 to vector<16x128xf32>
    %11 = arith.addf %9, %10 : vector<16x128xf32>
    %cst_6 = arith.constant 5.000000e-01 : f32
    %12 = vector.broadcast %cst_6 : f32 to vector<16x128xf32>
    %13 = arith.mulf %12, %11 : vector<16x128xf32>
    %14 = arith.minimumf %13, %6 : vector<16x128xf32>
    %15 = arith.addf %13, %6 : vector<16x128xf32>
    %c0_7 = arith.constant 0 : index
    %c0_8 = arith.constant 0 : index
    %c0_9 = arith.constant 0 : index
    %16 = vector.load %arg4[%c0_7, %c0_8, %c0_9] : memref<1x8x128xf32, #tpu.memory_space<vmem>>, vector<1x8x128xf32>
    %17 = vector.shape_cast %14 : vector<16x128xf32> to vector<2x8x128xf32>
    %cst_10 = arith.constant dense<0.000000e+00> : vector<8x128xf32>
    %18 = vector.multi_reduction <add>, %17, %cst_10 [0] : vector<2x8x128xf32> to vector<8x128xf32>
    %19 = vector.shape_cast %18 : vector<8x128xf32> to vector<1x8x128xf32>
    %20 = arith.addf %16, %19 : vector<1x8x128xf32>
    %c0_11 = arith.constant 0 : index
    %c0_12 = arith.constant 0 : index
    %c0_13 = arith.constant 0 : index
    %21 = vector.load %arg4[%c0_11, %c0_12, %c0_13] : memref<1x8x128xf32, #tpu.memory_space<vmem>>, vector<1x8x128xf32>
    tpu.vector_store %arg4[%c0_11, %c0_12, %c0_13], %20 {strides = array<i32>} : memref<1x8x128xf32, #tpu.memory_space<vmem>>, vector<1x8x128xf32>,
    %c0_14 = arith.constant 0 : index
    %c0_15 = arith.constant 0 : index
    %c0_16 = arith.constant 0 : index
    %22 = vector.load %arg5[%c0_14, %c0_15, %c0_16] : memref<1x8x128xf32, #tpu.memory_space<vmem>>, vector<1x8x128xf32>
    %23 = vector.shape_cast %15 : vector<16x128xf32> to vector<2x8x128xf32>
    %cst_17 = arith.constant dense<0.000000e+00> : vector<8x128xf32>
    %24 = vector.multi_reduction <add>, %23, %cst_17 [0] : vector<2x8x128xf32> to vector<8x128xf32>
    %25 = vector.shape_cast %24 : vector<8x128xf32> to vector<1x8x128xf32>
    %26 = arith.addf %22, %25 : vector<1x8x128xf32>
    %c0_18 = arith.constant 0 : index
    %c0_19 = arith.constant 0 : index
    %c0_20 = arith.constant 0 : index
    %27 = vector.load %arg5[%c0_18, %c0_19, %c0_20] : memref<1x8x128xf32, #tpu.memory_space<vmem>>, vector<1x8x128xf32>
    tpu.vector_store %arg5[%c0_18, %c0_19, %c0_20], %26 {strides = array<i32>} : memref<1x8x128xf32, #tpu.memory_space<vmem>>, vector<1x8x128xf32>,
    return
  }
  func.func @transform_0(%arg0: i32, %arg1: i32) -> (i32, i32) {
    %c0_i32 = arith.constant 0 : i32
    return %arg0, %arg1 : i32, i32
  }
  func.func @transform_1(%arg0: i32, %arg1: i32) -> (i32, i32) {
    %c0_i32 = arith.constant 0 : i32
    return %arg0, %arg1 : i32, i32
  }
  func.func @transform_2(%arg0: i32, %arg1: i32) -> (i32, i32, i32) {
    %c0_i32 = arith.constant 0 : i32
    %c0_i32_0 = arith.constant 0 : i32
    %c0_i32_1 = arith.constant 0 : i32
    %c0_i32_2 = arith.constant 0 : i32
    return %c0_i32, %c0_i32_0, %c0_i32_1 : i32, i32, i32
  }
  func.func @transform_3(%arg0: i32, %arg1: i32) -> (i32, i32, i32) {
    %c0_i32 = arith.constant 0 : i32
    %c0_i32_0 = arith.constant 0 : i32
    %c0_i32_1 = arith.constant 0 : i32
    %c0_i32_2 = arith.constant 0 : i32
    return %c0_i32, %c0_i32_0, %c0_i32_1 : i32, i32, i32
  }
}

</mosaic_0001>

<llo_original>
// kernel: tpu_custom_call.1
$region0: #{tpu_custom_call.1}
  #allocation0 [shape = 'u32[]', space=smem, size = 0x4, offset = 0x4, fixed_abs, tag = 'smem constant byte address 0x4 - core index']
  #allocation1 [shape = 'u32[144,128]{1,0:T(1,128)}', space=vmem, size = 0x12000, scoped, tag = 'internal scratch']
  %s0 = inlined_call_operand.hbm [shape: f32[16,128], index: 0, kind: input, shape index: {}]
  %s1 = inlined_call_operand.hbm [shape: f32[16,128], index: 1, kind: input, shape index: {}]
  %s2 = inlined_call_operand.hbm [shape: f32[1,8,128], index: 2, kind: output, shape index: {0}]
  %s3 = inlined_call_operand.hbm [shape: f32[1,8,128], index: 3, kind: output, shape index: {1}]
  %4 = xla_tuple %s2, %s3
  %s5 = sld [smem:[#allocation0]]
  $region38: #{tpu_custom_call.1} parent=0
    _
  %s7 = ssub.s32 1, %s5
  %s8 = scalar_select 0, %s7, %s5
  $region1: #{tpu_custom_call.1} parent=0
    #allocation2 [shape = 'u8[8192]{0}', space=vmem, size = 0x2000, scoped, tag = 'input window, operand 0, single buffered']
    #allocation3 [shape = 's32[1]{0}', space=sflag, size = 0x4, scoped, tag = 'scoped memory for tpu_custom_call.1']
    #allocation4 [shape = 's32[1]{0}', space=sflag, size = 0x4, scoped, tag = 'scoped memory for tpu_custom_call.1']
    #allocation5 [shape = 'u8[8192]{0}', space=vmem, size = 0x2000, scoped, tag = 'input window, operand 1, single buffered']
    #allocation6 [shape = 's32[1]{0}', space=sflag, size = 0x4, scoped, tag = 'scoped memory for tpu_custom_call.1']
    #allocation7 [shape = 'u8[4096]{0}', space=vmem, size = 0x1000, scoped, tag = 'output window, operand 0, single buffered']
    #allocation8 [shape = 'u8[4096]{0}', space=vmem, size = 0x1000, scoped, tag = 'output window, operand 1, single buffered']
    #allocation9 [shape = 's32[1]{0}', space=sflag, size = 0x4, scoped, tag = 'scoped memory for tpu_custom_call.1']
    %9 = vsyncpa [#allocation3], 0
    %10 = vsyncpa [#allocation6], 0
    %11 = vsyncpa [#allocation4], 0
    %12 = vsyncpa [#allocation9], 0
    // Predicated region
    $region2: #{tpu_custom_call.1} parent=1 // pred_check
      _
    $region3: #{tpu_custom_call.1} parent=1 // pred_check_branch
      %14 = sbr.rel (0) target = $region5
    $region4: #{tpu_custom_call.1} parent=1 // pred_region
      %s16 = ssub.s32 256, 256
      %17 = vsyncadd [#allocation3], %s16
      %s18 = sshll.u32 [#allocation2], 4
      %s19 = int_to_ptr.vmem [resolvable:$true] %s18
      %24 = dma.hbm_to_vmem [thread:$0]  %s0, 256, %s19, [#allocation3], 128, 128, 8
    $region5: #{tpu_custom_call.1} parent=1 // pred_fallthru
      _
    // Predicated region
    $region6: #{tpu_custom_call.1} parent=1 // pred_check
      _
    $region7: #{tpu_custom_call.1} parent=1 // pred_check_branch
      %26 = sbr.rel (0) target = $region9
    $region8: #{tpu_custom_call.1} parent=1 // pred_region
      %s28 = ssub.s32 256, 256
      %29 = vsyncadd [#allocation6], %s28
      %s30 = sshll.u32 [#allocation5], 4
      %s31 = int_to_ptr.vmem [resolvable:$true] %s30
      %36 = dma.hbm_to_vmem [thread:$0]  %s1, 256, %s31, [#allocation6], 128, 128, 8
    $region9: #{tpu_custom_call.1} parent=1 // pred_fallthru
      _
    // Predicated region
    $region10: #{tpu_custom_call.1} parent=1 // pred_check
      _
    $region11: #{tpu_custom_call.1} parent=1 // pred_check_branch
      %38 = sbr.rel (0) target = $region13
    $region12: #{tpu_custom_call.1} parent=1 // pred_region
      %39 = dma.done [#allocation3], 256
    $region13: #{tpu_custom_call.1} parent=1 // pred_fallthru
      _
    // Predicated region
    $region14: #{tpu_custom_call.1} parent=1 // pred_check
      _
    $region15: #{tpu_custom_call.1} parent=1 // pred_check_branch
      %41 = sbr.rel (0) target = $region17
    $region16: #{tpu_custom_call.1} parent=1 // pred_region
      %42 = dma.done [#allocation6], 256
    $region17: #{tpu_custom_call.1} parent=1 // pred_fallthru
      _
    %p43 = scmp.eq.s32.totalorder 0, 0
    %p44 = scmp.eq.s32.totalorder 0, 0
    %p45 = pnand %p43, %p44
    %p46 = pneg %p45
    // Predicated region
    $region18: #{tpu_custom_call.1} parent=1 // pred_check
      _
    $region19: #{tpu_custom_call.1} parent=1 // pred_check_branch
      %48 = sbr.rel (%p45) target = $region21
    $region20: #{tpu_custom_call.1} parent=1 // pred_region
      %49 = vst [vmem:[#allocation7] sm:$0xff] 0.0
      %50 = vst [vmem:[#allocation8] sm:$0xff] 0.0
    $region21: #{tpu_custom_call.1} parent=1 // pred_fallthru
      _
    %v51 = vld [vmem:[#allocation2] sm:$0xff]
    %v52 = vld [vmem:[#allocation2 + $0x8] sm:$0xff]
    %v53 = vld [vmem:[#allocation5] sm:$0xff]
    %v54 = vld [vmem:[#allocation5 + $0x8] sm:$0xff]
    %v55 = vmul.f32 %v51, 0.5
    %v56 = vmul.f32 %v52, 0.5
    %v57 = vtanh.pop %v55
    %v58 = vtanh.pop %v56
    %v59 = vadd.f32 %v57, 1.0
    %v60 = vadd.f32 %v58, 1.0
    %v61 = vmul.f32 %v59, 0.5
    %v62 = vmul.f32 %v60, 0.5
    %v63 = vmin.f32 %v61, %v53
    %v64 = vmin.f32 %v62, %v54
    %v65 = vadd.f32 %v61, %v53
    %v66 = vadd.f32 %v62, %v54
    %v67 = vld [vmem:[#allocation7] sm:$0xff]
    %v68 = vadd.f32 %v63, %v64
    %v69 = vadd.f32 %v67, %v68
    %70 = vst [vmem:[#allocation7] sm:$0xff] %v69
    %v71 = vld [vmem:[#allocation8] sm:$0xff]
    %v72 = vadd.f32 %v65, %v66
    %v73 = vadd.f32 %v71, %v72
    %74 = vst [vmem:[#allocation8] sm:$0xff] %v73
    // Predicated region
    $region22: #{tpu_custom_call.1} parent=1 // pred_check
      _
    $region23: #{tpu_custom_call.1} parent=1 // pred_check_branch
      %76 = sbr.rel (0) target = $region25
    $region24: #{tpu_custom_call.1} parent=1 // pred_region
      %s78 = ssub.s32 128, 128
      %79 = vsyncadd [#allocation4], %s78
      %s81 = sshll.u32 [#allocation7], 4
      %s82 = int_to_ptr.vmem [resolvable:$true] %s81
      %84 = dma.vmem_to_hbm [thread:$0]  %s82, 128, %s2, [#allocation4]
    $region25: #{tpu_custom_call.1} parent=1 // pred_fallthru
      _
    // Predicated region
    $region26: #{tpu_custom_call.1} parent=1 // pred_check
      _
    $region27: #{tpu_custom_call.1} parent=1 // pred_check_branch
      %86 = sbr.rel (0) target = $region29
    $region28: #{tpu_custom_call.1} parent=1 // pred_region
      %s88 = ssub.s32 128, 128
      %89 = vsyncadd [#allocation9], %s88
      %s91 = sshll.u32 [#allocation8], 4
      %s92 = int_to_ptr.vmem [resolvable:$true] %s91
      %94 = dma.vmem_to_hbm [thread:$0]  %s92, 128, %s3, [#allocation9]
    $region29: #{tpu_custom_call.1} parent=1 // pred_fallthru
      _
    // Predicated region
    $region30: #{tpu_custom_call.1} parent=1 // pred_check
      _
    $region31: #{tpu_custom_call.1} parent=1 // pred_check_branch
      %96 = sbr.rel (0) target = $region33
    $region32: #{tpu_custom_call.1} parent=1 // pred_region
      %97 = dma.done [#allocation4], 128
    $region33: #{tpu_custom_call.1} parent=1 // pred_fallthru
      _
    // Predicated region
    $region34: #{tpu_custom_call.1} parent=1 // pred_check
      _
    $region35: #{tpu_custom_call.1} parent=1 // pred_check_branch
      %99 = sbr.rel (0) target = $region37
    $region36: #{tpu_custom_call.1} parent=1 // pred_region
      %100 = dma.done [#allocation9], 128
    $region37: #{tpu_custom_call.1} parent=1 // pred_fallthru
      _
    %101 = vsyncpa [#allocation3], 1
    %102 = vsyncpa [#allocation6], 1
    %103 = vsyncpa [#allocation4], 1
    %104 = vsyncpa [#allocation9], 1

</llo_original>
